<compile_context>
chip_gen: v5e
topology: v5e:2x2
jax: 0.10.0
libtpu: 0.0.40
codegen_flags: <defaults>
</compile_context>

<pallas_src>
import functools

import jax
import jax.numpy as jnp
from jax.experimental import pallas as pl
from jax.experimental.pallas import tpu as pltpu


def _round_up(x, m):
    return ((x + m - 1) // m) * m


def _pick_batch_tile(n, cap=8):
    """Largest divisor of n that is <= cap (images packed per grid step)."""
    for bt in range(min(n, cap), 0, -1):
        if n % bt == 0:
            return bt
    return 1


# ------------------------------- fused Pallas kernel -------------------------------

def _discriminator_kernel(x1_ref, w1_ref, b1_ref, w2_ref, b2_ref, o_ref, *, Ho, Wo, slope):
    """BT images per step: conv1 matmul + bias + LeakyReLU + fused-tap conv2 + bias.

    x1_ref: (BT, M, K1)    bf16  stride-2 im2col patches (M = Ho*Wo, K1 = 9*Cin, unpadded)
    w1_ref: (K1, C1)       bf16  conv1 weights
    b1_ref: (1, C1)        f32   conv1 bias
    w2_ref: (9*C1, CP)     bf16  conv2 weights, taps flattened into K (CP = Cout rounded to 8)
    b2_ref: (1, CP)        f32   conv2 bias (zero-padded)
    o_ref : (BT, M, CP)    bf16  output block
    """
    BT, M, K1 = x1_ref.shape
    C1 = w1_ref.shape[1]
    CP = w2_ref.shape[1]

    # ---- conv1: ONE MXU matmul over pre-built patches (bf16 operands, f32 acc) ----
    h = jnp.dot(x1_ref[...].reshape(BT * M, K1), w1_ref[...],
                preferred_element_type=jnp.float32)                      # (BT*M, C1)
    h = h + b1_ref[...]
    h = jnp.where(h >= 0, h, slope * h)                                  # LeakyReLU(0.2), f32 VPU

    # ---- conv2 (3x3, s=1, p=1) on the VMEM-resident activation ----
    # Zero-pad the spatial border once (per image -> no cross-image bleed when BT > 1),
    # cast to bf16 once, take the 9 taps as static slices, build one (rows, 576) slab.
    hb = h.reshape(BT, Ho, Wo, C1).astype(jnp.bfloat16)
    zw = jnp.zeros((BT, Ho, 1, C1), jnp.bfloat16)
    hb = jnp.concatenate([zw, hb, zw], axis=2)                           # (BT, Ho, Wo+2, C1)
    zh = jnp.zeros((BT, 1, Wo + 2, C1), jnp.bfloat16)
    hb = jnp.concatenate([zh, hb, zh], axis=1)                           # (BT, Ho+2, Wo+2, C1)

    slab = jnp.concatenate(
        [hb[:, ki:ki + Ho, kj:kj + Wo, :] for ki in range(3) for kj in range(3)],
        axis=-1).reshape(BT * M, 9 * C1)                                 # (BT*M, 576) bf16

    # ---- ONE K=576 MXU matmul (accumulation stays inside the MXU), f32 epilogue ----
    y = jnp.dot(slab, w2_ref[...], preferred_element_type=jnp.float32)   # (BT*M, CP)
    y = y + b2_ref[...]
    o_ref[...] = y.reshape(BT, M, CP).astype(o_ref.dtype)


# ------------------------------- parameter prep (hoisted, done once) -------------------------------

def prepare_params(params):
    """Convert PyTorch-layout (OIHW) weights into matmul-ready matrices once."""
    w1, b1, w2, b2 = params["w1"], params["b1"], params["w2"], params["b2"]
    C1, Cin = int(w1.shape[0]), int(w1.shape[1])
    Cout = int(w2.shape[0])
    K1 = 9 * Cin
    CP = _round_up(Cout, 8)          # pad output channels only to a sublane multiple

    # conv1: OIHW -> (kh, kw, Cin, C1) -> (K1, C1); tap-major / channel-minor ordering
    w1f = jnp.transpose(w1, (2, 3, 1, 0)).reshape(K1, C1).astype(jnp.bfloat16)
    # conv2: OIHW -> (kh, kw, C1, Cout) -> (9*C1, Cout), pad Cout -> CP
    w2f = jnp.transpose(w2, (2, 3, 1, 0)).reshape(9 * C1, Cout)
    w2f = jnp.pad(w2f, ((0, 0), (0, CP - Cout))).astype(jnp.bfloat16)

    b1f = b1.reshape(1, C1).astype(jnp.float32)
    b2f = jnp.pad(b2, (0, CP - Cout)).reshape(1, CP).astype(jnp.float32)

    prep = {"w1": w1f, "b1": b1f, "w2": w2f, "b2": b2f}
    meta = {"Cin": Cin, "C1": C1, "Cout": Cout, "K1": K1, "CP": CP}
    return prep, meta


# ------------------------------- forward -------------------------------

def discriminator_forward(x_nchw, prep, meta):
    """Forward pass matching the PyTorch Discriminator. Input/output are NCHW f32."""
    Cin, C1, Cout = meta["Cin"], meta["C1"], meta["Cout"]
    K1, CP = meta["K1"], meta["CP"]
    N, Cx, H, W = x_nchw.shape
    assert Cx == Cin

    Ho = (H + 2 - 3) // 2 + 1       # conv1: k=3, s=2, p=1
    Wo = (W + 2 - 3) // 2 + 1       # conv2 (s=1, p=1) keeps Ho x Wo
    M = Ho * Wo

    # Cheap wrapper-side im2col for conv1 (K1 = 9*Cin is tiny): no 128-padding, ships as bf16.
    x = jnp.transpose(x_nchw, (0, 2, 3, 1))                              # NHWC
    xp = jnp.pad(x, ((0, 0), (1, 1), (1, 1), (0, 0)))
    taps = [xp[:, i:i + 2 * Ho - 1:2, j:j + 2 * Wo - 1:2, :]
            for i in range(3) for j in range(3)]
    x1 = jnp.concatenate(taps, axis=-1).reshape(N, M, K1).astype(jnp.bfloat16)

    BT = _pick_batch_tile(N)
    kernel = functools.partial(_discriminator_kernel, Ho=Ho, Wo=Wo, slope=0.2)
    out = pl.pallas_call(
        kernel,
        out_shape=jax.ShapeDtypeStruct((N, M, CP), jnp.bfloat16),
        grid=(N // BT,),
        in_specs=[
            pl.BlockSpec((BT, M, K1), lambda g: (g, 0, 0)),
            pl.BlockSpec((K1, C1), lambda g: (0, 0)),
            pl.BlockSpec((1, C1), lambda g: (0, 0)),
            pl.BlockSpec((9 * C1, CP), lambda g: (0, 0)),
            pl.BlockSpec((1, CP), lambda g: (0, 0)),
        ],
        out_specs=pl.BlockSpec((BT, M, CP), lambda g: (g, 0, 0)),
        compiler_params=pltpu.CompilerParams(
            dimension_semantics=("parallel",),
            vmem_limit_bytes=64 * 1024 * 1024,
        ),
    )(x1, prep["w1"], prep["b1"], prep["w2"], prep["b2"])

    # Drop the (tiny) channel padding, back to NCHW f32.
    y = out[:, :, :Cout].astype(jnp.float32).reshape(N, Ho, Wo, Cout)
    return jnp.transpose(y, (0, 3, 1, 2))


# ------------------------------- reference & params -------------------------------

def _reference_forward(x_nchw, params):
    """Pure-XLA f32 reference matching the PyTorch module."""
    y = jax.lax.conv_general_dilated(
        x_nchw, params["w1"], window_strides=(2, 2), padding=((1, 1), (1, 1)),
        dimension_numbers=("NCHW", "OIHW", "NCHW"))
    y = y + params["b1"][None, :, None, None]
    y = jnp.where(y >= 0, y, 0.2 * y)
    z = jax.lax.conv_general_dilated(
        y, params["w2"], window_strides=(1, 1), padding=((1, 1), (1, 1)),
        dimension_numbers=("NCHW", "OIHW", "NCHW"))
    return z + params["b2"][None, :, None, None]


def init_params(key, input_nc, output_nc):
    """Deterministic synthetic parameters with the module's shapes (PyTorch OIHW)."""
    k1, k2, k3, k4 = jax.random.split(key, 4)
    return {
        "w1": jax.random.normal(k1, (64, input_nc, 3, 3), jnp.float32) * 0.05,
        "b1": jax.random.normal(k2, (64,), jnp.float32) * 0.05,
        "w2": jax.random.normal(k3, (output_nc, 64, 3, 3), jnp.float32) * 0.05,
        "b2": jax.random.normal(k4, (output_nc,), jnp.float32) * 0.05,
    }


if __name__ == "__main__":
    input_nc, output_nc = 4, 3
    key = jax.random.PRNGKey(0)
    kx, kp = jax.random.split(key)

    x = jax.random.normal(kx, (2, input_nc, 16, 16), jnp.float32)   # NCHW, like PyTorch
    raw_params = init_params(kp, input_nc, output_nc)

    prep, meta = prepare_params(raw_params)                          # done once, off the hot path
    fwd = jax.jit(functools.partial(discriminator_forward, meta=meta))

    out = jax.block_until_ready(fwd(x, prep))

    # Shape check: conv1 (s=2, p=1) -> 8x8 spatial; conv2 keeps 8x8.
    assert out.shape == (2, output_nc, 8, 8), out.shape
    assert bool(jnp.all(jnp.isfinite(out)))

    # Numerical check vs f32 XLA reference (bf16 MXU operands + bf16 store -> loose tolerance).
    ref = jax.block_until_ready(jax.jit(_reference_forward)(x, raw_params))
    max_err = float(jnp.max(jnp.abs(out - ref)))
    assert max_err < 5e-2, f"max abs error {max_err}"

    print("KERNEL_OK")
</pallas_src>

<mosaic_0001>
module attributes {stable_mosaic.version = 11 : i64} {
  func.func @_discriminator_kernel(%arg0: i32, %arg1: memref<2x64x36xbf16, #tpu.memory_space<vmem>>, %arg2: memref<36x64xbf16, #tpu.memory_space<vmem>>, %arg3: memref<1x64xf32, #tpu.memory_space<vmem>>, %arg4: memref<576x8xbf16, #tpu.memory_space<vmem>>, %arg5: memref<1x8xf32, #tpu.memory_space<vmem>>, %arg6: memref<2x64x8xbf16, #tpu.memory_space<vmem>>) attributes {dimension_semantics = [#tpu.dimension_semantics<parallel>], iteration_bounds = array<i64: 1>, scalar_prefetch = 0 : i64, scratch_operands = 0 : i64, tpu.core_type = #tpu.core_type<tc>, window_params = [{transform_indices = @transform_0, window_bounds = array<i64: 2, 64, 36>}, {pipeline_mode = #tpu.pipeline_mode<synchronous>, transform_indices = @transform_1, window_bounds = array<i64: 36, 64>}, {pipeline_mode = #tpu.pipeline_mode<synchronous>, transform_indices = @transform_2, window_bounds = array<i64: 1, 64>}, {pipeline_mode = #tpu.pipeline_mode<synchronous>, transform_indices = @transform_3, window_bounds = array<i64: 576, 8>}, {pipeline_mode = #tpu.pipeline_mode<synchronous>, transform_indices = @transform_4, window_bounds = array<i64: 1, 8>}, {transform_indices = @transform_5, window_bounds = array<i64: 2, 64, 8>}]} {
    %c0 = arith.constant 0 : index
    %c0_0 = arith.constant 0 : index
    %c0_1 = arith.constant 0 : index
    %0 = vector.load %arg1[%c0, %c0_0, %c0_1] : memref<2x64x36xbf16, #tpu.memory_space<vmem>>, vector<2x64x36xbf16>
    %1 = vector.shape_cast %0 : vector<2x64x36xbf16> to vector<128x36xbf16>
    %c0_2 = arith.constant 0 : index
    %c0_3 = arith.constant 0 : index
    %2 = vector.load %arg2[%c0_2, %c0_3] : memref<36x64xbf16, #tpu.memory_space<vmem>>, vector<36x64xbf16>
    %cst = arith.constant dense<0.000000e+00> : vector<128x64xf32>
    %3 = tpu.matmul %1, %2, %cst {dimension_numbers = #tpu.dot_dimension_numbers<[1], [0], [0], [1], [0, 0, 1, 1], [], []>} : vector<128x36xbf16>, vector<36x64xbf16>, vector<128x64xf32> -> vector<128x64xf32>
    %c0_4 = arith.constant 0 : index
    %c0_5 = arith.constant 0 : index
    %4 = vector.load %arg3[%c0_4, %c0_5] : memref<1x64xf32, #tpu.memory_space<vmem>>, vector<1x64xf32>
    %5 = vector.broadcast %4 : vector<1x64xf32> to vector<128x64xf32>
    %6 = arith.addf %3, %5 : vector<128x64xf32>
    %cst_6 = arith.constant 0.000000e+00 : f32
    %7 = vector.broadcast %cst_6 : f32 to vector<128x64xf32>
    %8 = arith.cmpf oge, %6, %7 : vector<128x64xf32>
    %cst_7 = arith.constant 2.000000e-01 : f32
    %9 = vector.broadcast %cst_7 : f32 to vector<128x64xf32>
    %10 = arith.mulf %9, %6 : vector<128x64xf32>
    %11 = arith.select %8, %6, %10 : vector<128x64xi1>, vector<128x64xf32>
    %12 = vector.shape_cast %11 : vector<128x64xf32> to vector<2x8x8x64xf32>
    %13 = arith.truncf %12 : vector<2x8x8x64xf32> to vector<2x8x8x64xbf16>
    %cst_8 = arith.constant 0.000000e+00 : bf16
    %14 = vector.broadcast %cst_8 : bf16 to vector<2x8x1x64xbf16>
    %15 = tpu.concatenate %14, %13, %14 in 2 : vector<2x8x1x64xbf16>, vector<2x8x8x64xbf16>, vector<2x8x1x64xbf16> -> vector<2x8x10x64xbf16>
    %cst_9 = arith.constant 0.000000e+00 : bf16
    %16 = vector.broadcast %cst_9 : bf16 to vector<2x1x10x64xbf16>
    %17 = tpu.concatenate %16, %15, %16 in 1 : vector<2x1x10x64xbf16>, vector<2x8x10x64xbf16>, vector<2x1x10x64xbf16> -> vector<2x10x10x64xbf16>
    %18 = vector.extract_strided_slice %17 {offsets = [0, 0, 0, 0], sizes = [2, 8, 8, 64], strides = [1, 1, 1, 1]} : vector<2x10x10x64xbf16> to vector<2x8x8x64xbf16>
    %19 = vector.extract_strided_slice %17 {offsets = [0, 0, 1, 0], sizes = [2, 8, 8, 64], strides = [1, 1, 1, 1]} : vector<2x10x10x64xbf16> to vector<2x8x8x64xbf16>
    %20 = vector.extract_strided_slice %17 {offsets = [0, 0, 2, 0], sizes = [2, 8, 8, 64], strides = [1, 1, 1, 1]} : vector<2x10x10x64xbf16> to vector<2x8x8x64xbf16>
    %21 = vector.extract_strided_slice %17 {offsets = [0, 1, 0, 0], sizes = [2, 8, 8, 64], strides = [1, 1, 1, 1]} : vector<2x10x10x64xbf16> to vector<2x8x8x64xbf16>
    %22 = vector.extract_strided_slice %17 {offsets = [0, 1, 1, 0], sizes = [2, 8, 8, 64], strides = [1, 1, 1, 1]} : vector<2x10x10x64xbf16> to vector<2x8x8x64xbf16>
    %23 = vector.extract_strided_slice %17 {offsets = [0, 1, 2, 0], sizes = [2, 8, 8, 64], strides = [1, 1, 1, 1]} : vector<2x10x10x64xbf16> to vector<2x8x8x64xbf16>
    %24 = vector.extract_strided_slice %17 {offsets = [0, 2, 0, 0], sizes = [2, 8, 8, 64], strides = [1, 1, 1, 1]} : vector<2x10x10x64xbf16> to vector<2x8x8x64xbf16>
    %25 = vector.extract_strided_slice %17 {offsets = [0, 2, 1, 0], sizes = [2, 8, 8, 64], strides = [1, 1, 1, 1]} : vector<2x10x10x64xbf16> to vector<2x8x8x64xbf16>
    %26 = vector.extract_strided_slice %17 {offsets = [0, 2, 2, 0], sizes = [2, 8, 8, 64], strides = [1, 1, 1, 1]} : vector<2x10x10x64xbf16> to vector<2x8x8x64xbf16>
    %27 = tpu.concatenate %18, %19, %20, %21, %22, %23, %24, %25, %26 in 3 : vector<2x8x8x64xbf16>, vector<2x8x8x64xbf16>, vector<2x8x8x64xbf16>, vector<2x8x8x64xbf16>, vector<2x8x8x64xbf16>, vector<2x8x8x64xbf16>, vector<2x8x8x64xbf16>, vector<2x8x8x64xbf16>, vector<2x8x8x64xbf16> -> vector<2x8x8x576xbf16>
    %28 = vector.shape_cast %27 : vector<2x8x8x576xbf16> to vector<128x576xbf16>
    %c0_10 = arith.constant 0 : index
    %c0_11 = arith.constant 0 : index
    %29 = vector.load %arg4[%c0_10, %c0_11] : memref<576x8xbf16, #tpu.memory_space<vmem>>, vector<576x8xbf16>
    %cst_12 = arith.constant dense<0.000000e+00> : vector<128x8xf32>
    %30 = tpu.matmul %28, %29, %cst_12 {dimension_numbers = #tpu.dot_dimension_numbers<[1], [0], [0], [1], [0, 0, 1, 1], [], []>} : vector<128x576xbf16>, vector<576x8xbf16>, vector<128x8xf32> -> vector<128x8xf32>
    %c0_13 = arith.constant 0 : index
    %c0_14 = arith.constant 0 : index
    %31 = vector.load %arg5[%c0_13, %c0_14] : memref<1x8xf32, #tpu.memory_space<vmem>>, vector<1x8xf32>
    %32 = vector.broadcast %31 : vector<1x8xf32> to vector<128x8xf32>
    %33 = arith.addf %30, %32 : vector<128x8xf32>
    %34 = vector.shape_cast %33 : vector<128x8xf32> to vector<2x64x8xf32>
    %35 = arith.truncf %34 : vector<2x64x8xf32> to vector<2x64x8xbf16>
    %c0_15 = arith.constant 0 : index
    %c0_16 = arith.constant 0 : index
    %c0_17 = arith.constant 0 : index
    %36 = vector.load %arg6[%c0_15, %c0_16, %c0_17] : memref<2x64x8xbf16, #tpu.memory_space<vmem>>, vector<2x64x8xbf16>
    tpu.vector_store %arg6[%c0_15, %c0_16, %c0_17], %35 {strides = array<i32>} : memref<2x64x8xbf16, #tpu.memory_space<vmem>>, vector<2x64x8xbf16>,
    return
  }
  func.func @transform_0(%arg0: i32) -> (i32, i32, i32) {
    %c0_i32 = arith.constant 0 : i32
    %c0_i32_0 = arith.constant 0 : i32
    %c0_i32_1 = arith.constant 0 : i32
    return %arg0, %c0_i32, %c0_i32_0 : i32, i32, i32
  }
  func.func @transform_1(%arg0: i32) -> (i32, i32) {
    %c0_i32 = arith.constant 0 : i32
    %c0_i32_0 = arith.constant 0 : i32
    %c0_i32_1 = arith.constant 0 : i32
    return %c0_i32, %c0_i32_0 : i32, i32
  }
  func.func @transform_2(%arg0: i32) -> (i32, i32) {
    %c0_i32 = arith.constant 0 : i32
    %c0_i32_0 = arith.constant 0 : i32
    %c0_i32_1 = arith.constant 0 : i32
    return %c0_i32, %c0_i32_0 : i32, i32
  }
  func.func @transform_3(%arg0: i32) -> (i32, i32) {
    %c0_i32 = arith.constant 0 : i32
    %c0_i32_0 = arith.constant 0 : i32
    %c0_i32_1 = arith.constant 0 : i32
    return %c0_i32, %c0_i32_0 : i32, i32
  }
  func.func @transform_4(%arg0: i32) -> (i32, i32) {
    %c0_i32 = arith.constant 0 : i32
    %c0_i32_0 = arith.constant 0 : i32
    %c0_i32_1 = arith.constant 0 : i32
    return %c0_i32, %c0_i32_0 : i32, i32
  }
  func.func @transform_5(%arg0: i32) -> (i32, i32, i32) {
    %c0_i32 = arith.constant 0 : i32
    %c0_i32_0 = arith.constant 0 : i32
    %c0_i32_1 = arith.constant 0 : i32
    return %arg0, %c0_i32, %c0_i32_0 : i32, i32, i32
  }
}

</mosaic_0001>

<llo_original>
// kernel: discriminator_forward.1
$region0: #{discriminator_forward.1}
  #allocation0 [shape = 'u32[]', space=smem, size = 0x4, offset = 0x4, fixed_abs, tag = 'smem constant byte address 0x4 - core index']
  #allocation1 [shape = 'u32[72,128]{1,0:T(1,128)}', space=vmem, size = 0x9000, scoped, tag = 'internal scratch']
  %s0 = inlined_call_operand.vmem [shape: bf16[2,64,36], index: 0, kind: input, shape index: {}]
  %s1 = inlined_call_operand.vmem [shape: bf16[36,64], index: 1, kind: input, shape index: {}]
  %s2 = inlined_call_operand.vmem [shape: f32[1,64], index: 2, kind: input, shape index: {}]
  %s3 = inlined_call_operand.vmem [shape: bf16[576,8], index: 3, kind: input, shape index: {}]
  %s4 = inlined_call_operand.vmem [shape: f32[1,8], index: 4, kind: input, shape index: {}]
  %s5 = inlined_call_operand.vmem [shape: bf16[2,64,8], index: 5, kind: output, shape index: {}]
  %s6 = sld [smem:[#allocation0]]
  $region30: #{discriminator_forward.1} parent=0
    _
  %s8 = ssub.s32 1, %s6
  %s9 = scalar_select 0, %s8, %s6
  // Predicated region
  $region2: #{discriminator_forward.1} parent=0 // pred_check
    _
  $region3: #{discriminator_forward.1} parent=0 // pred_check_branch
    %11 = sbr.rel (0) target = $region5
  $region4: #{discriminator_forward.1} parent=0 // pred_region
    _
  $region5: #{discriminator_forward.1} parent=0 // pred_fallthru
    _
  // Predicated region
  $region6: #{discriminator_forward.1} parent=0 // pred_check
    _
  $region7: #{discriminator_forward.1} parent=0 // pred_check_branch
    %13 = sbr.rel (0) target = $region9
  $region8: #{discriminator_forward.1} parent=0 // pred_region
    _
  $region9: #{discriminator_forward.1} parent=0 // pred_fallthru
    _
  // Predicated region
  $region10: #{discriminator_forward.1} parent=0 // pred_check
    _
  $region11: #{discriminator_forward.1} parent=0 // pred_check_branch
    %15 = sbr.rel (0) target = $region13
  $region12: #{discriminator_forward.1} parent=0 // pred_region
    _
  $region13: #{discriminator_forward.1} parent=0 // pred_fallthru
    _
  // Predicated region
  $region14: #{discriminator_forward.1} parent=0 // pred_check
    _
  $region15: #{discriminator_forward.1} parent=0 // pred_check_branch
    %17 = sbr.rel (0) target = $region17
  $region16: #{discriminator_forward.1} parent=0 // pred_region
    _
  $region17: #{discriminator_forward.1} parent=0 // pred_fallthru
    _
  // Predicated region
  $region18: #{discriminator_forward.1} parent=0 // pred_check
    _
  $region19: #{discriminator_forward.1} parent=0 // pred_check_branch
    %19 = sbr.rel (0) target = $region21
  $region20: #{discriminator_forward.1} parent=0 // pred_region
    _
  $region21: #{discriminator_forward.1} parent=0 // pred_fallthru
    _
  %v21 = vld [vmem:[%s0] sm:$0xf]
  %v22 = vld [vmem:[%s0 + $0x4] sm:$0xf]
  %v23 = vld [vmem:[%s0 + $0x8] sm:$0xf]
  %v24 = vld [vmem:[%s0 + $0xc] sm:$0xf]
  %v25 = vld [vmem:[%s0 + $0x10] sm:$0xf]
  %v26 = vld [vmem:[%s0 + $0x14] sm:$0xf]
  %v27 = vld [vmem:[%s0 + $0x18] sm:$0xf]
  %v28 = vld [vmem:[%s0 + $0x1c] sm:$0xf]
  %v29 = vld [vmem:[%s0 + $0x20] sm:$0xf]
  %v30 = vld [vmem:[%s0 + $0x24] sm:$0xf]
  %v31 = vld [vmem:[%s0 + $0x28] sm:$0xf]
  %v32 = vld [vmem:[%s0 + $0x2c] sm:$0xf]
  %v33 = vld [vmem:[%s0 + $0x30] sm:$0xf]
  %v34 = vld [vmem:[%s0 + $0x34] sm:$0xf]
  %v35 = vld [vmem:[%s0 + $0x38] sm:$0xf]
  %v36 = vld [vmem:[%s0 + $0x3c] sm:$0xf]
  %v37 = vld [vmem:[%s1] sm:$0xf]
  %v38 = vld [vmem:[%s1 + $0x4] sm:$0xf]
  %v39 = vld [vmem:[%s1 + $0x8] sm:$0xf]
  %v40 = vld [vmem:[%s1 + $0xc] sm:$0xf]
  %v41 = vld [vmem:[%s1 + $0x10] sm:$0x3]
  %v42 = vld [vmem:[%s2] sm:$0x1]
  %v44 = vperm.slane %v42, 0
  %v62 = vunpack.c.l.b16 %v21
  %v63 = vunpack.c.l.b16 %v22
  %v64 = vunpack.c.l.b16 %v23
  %v65 = vunpack.c.l.b16 %v24
  %v66 = vunpack.c.l.b16 %v25
  %v67 = vunpack.c.l.b16 %v26
  %v68 = vunpack.c.l.b16 %v27
  %v69 = vunpack.c.l.b16 %v28
  %v70 = vunpack.c.l.b16 %v29
  %v71 = vunpack.c.l.b16 %v30
  %v72 = vunpack.c.l.b16 %v31
  %v73 = vunpack.c.l.b16 %v32
  %v74 = vunpack.c.l.b16 %v33
  %v75 = vunpack.c.l.b16 %v34
  %v76 = vunpack.c.l.b16 %v35
  %v77 = vunpack.c.l.b16 %v36
  %v78 = vpack.c.b16 %v63, %v62
  %v79 = vpack.c.b16 %v65, %v64
  %v80 = vpack.c.b16 %v67, %v66
  %v81 = vpack.c.b16 %v69, %v68
  %v82 = vpack.c.b16 %v71, %v70
  %v83 = vpack.c.b16 %v73, %v72
  %v84 = vpack.c.b16 %v75, %v74
  %v85 = vpack.c.b16 %v77, %v76
  %v91 = vunpack.c.l.b16 %v37
  %v92 = vunpack.c.l.b16 %v38
  %v93 = vunpack.c.l.b16 %v39
  %v94 = vunpack.c.l.b16 %v40
  %v95 = vunpack.c.l.b16 %v41
  %v96 = vpack.c.b16 %v92, %v91
  %v97 = vpack.c.b16 %v94, %v93
  %v98 = vpack.c.b16 %v95, %v95
  %vm101 = vcmask 293888
  %v103 = vsel %vm101, %v78, 0
  %v106 = vsel %vm101, %v79, 0
  %v109 = vsel %vm101, %v80, 0
  %v112 = vsel %vm101, %v81, 0
  %v115 = vsel %vm101, %v82, 0
  %v118 = vsel %vm101, %v83, 0
  %v121 = vsel %vm101, %v84, 0
  %v124 = vsel %vm101, %v85, 0
  %vm126 = vcmask 1041408
  %v128 = vsel %vm126, %v98, 0
  %130 = vmatpush.bf16.msra.mxu0 0
  %131 = vmatpush.bf16.msra.mxu0 0
  %132 = vmatpush.bf16.msra.mxu0 0
  %133 = vmatpush.bf16.msra.mxu0 0
  %134 = vmatpush.bf16.msra.mxu0 0
  %135 = vmatpush.bf16.msra.mxu0 %v128
  %136 = vmatpush.bf16.msra.mxu0 %v97
  %137 = vmatpush.bf16.msra.mxu0 %v96
  %138 = vmatmul.bf16.gmra.mxu0 %v103
  %v139 = vpop.f32.mrf.mxu0
  %v140 = vadd.f32 %v44, %v139
  %v141 = vpop.f32.mrf.mxu0
  %v142 = vadd.f32 %v44, %v141
  %143 = vmatmul.bf16.gmra.mxu0 %v106
  %v144 = vpop.f32.mrf.mxu0
  %v145 = vadd.f32 %v44, %v144
  %v146 = vpop.f32.mrf.mxu0
  %v147 = vadd.f32 %v44, %v146
  %148 = vmatmul.bf16.gmra.mxu0 %v109
  %v149 = vpop.f32.mrf.mxu0
  %v150 = vadd.f32 %v44, %v149
  %v151 = vpop.f32.mrf.mxu0
  %v152 = vadd.f32 %v44, %v151
  %153 = vmatmul.bf16.gmra.mxu0 %v112
  %v154 = vpop.f32.mrf.mxu0
  %v155 = vadd.f32 %v44, %v154
  %v156 = vpop.f32.mrf.mxu0
  %v157 = vadd.f32 %v44, %v156
  %158 = vmatmul.bf16.gmra.mxu0 %v115
  %v159 = vpop.f32.mrf.mxu0
  %v160 = vadd.f32 %v44, %v159
  %v161 = vpop.f32.mrf.mxu0
  %v162 = vadd.f32 %v44, %v161
  %163 = vmatmul.bf16.gmra.mxu0 %v118
  %v164 = vpop.f32.mrf.mxu0
  %v165 = vadd.f32 %v44, %v164
  %v166 = vpop.f32.mrf.mxu0
  %v167 = vadd.f32 %v44, %v166
  %168 = vmatmul.bf16.gmra.mxu0 %v121
  %v169 = vpop.f32.mrf.mxu0
  %v170 = vadd.f32 %v44, %v169
  %v171 = vpop.f32.mrf.mxu0
  %v172 = vadd.f32 %v44, %v171
  %173 = vmatmul.bf16.gmra.mxu0 %v124
  %v174 = vpop.f32.mrf.mxu0
  %v175 = vadd.f32 %v44, %v174
  %v176 = vpop.f32.mrf.mxu0
  %v177 = vadd.f32 %v44, %v176
  %178 = vdwg.mxu0
  %vm179 = vcmp.ge.f32.partialorder %v140, 0.0
  %vm180 = vcmp.ge.f32.partialorder %v142, 0.0
  %vm181 = vcmp.ge.f32.partialorder %v145, 0.0
  %vm182 = vcmp.ge.f32.partialorder %v147, 0.0
  %vm183 = vcmp.ge.f32.partialorder %v150, 0.0
  %vm184 = vcmp.ge.f32.partialorder %v152, 0.0
  %vm185 = vcmp.ge.f32.partialorder %v155, 0.0
  %vm186 = vcmp.ge.f32.partialorder %v157, 0.0
  %vm187 = vcmp.ge.f32.partialorder %v160, 0.0
  %vm188 = vcmp.ge.f32.partialorder %v162, 0.0
  %vm189 = vcmp.ge.f32.partialorder %v165, 0.0
  %vm190 = vcmp.ge.f32.partialorder %v167, 0.0
  %vm191 = vcmp.ge.f32.partialorder %v170, 0.0
  %vm192 = vcmp.ge.f32.partialorder %v172, 0.0
  %vm193 = vcmp.ge.f32.partialorder %v175, 0.0
  %vm194 = vcmp.ge.f32.partialorder %v177, 0.0
  %v195 = vmul.f32 %v140, 0.2
  %v196 = vmul.f32 %v142, 0.2
  %v197 = vmul.f32 %v145, 0.2
  %v198 = vmul.f32 %v147, 0.2
  %v199 = vmul.f32 %v150, 0.2
  %v200 = vmul.f32 %v152, 0.2
  %v201 = vmul.f32 %v155, 0.2
  %v202 = vmul.f32 %v157, 0.2
  %v203 = vmul.f32 %v160, 0.2
  %v204 = vmul.f32 %v162, 0.2
  %v205 = vmul.f32 %v165, 0.2
  %v206 = vmul.f32 %v167, 0.2
  %v207 = vmul.f32 %v170, 0.2
  %v208 = vmul.f32 %v172, 0.2
  %v209 = vmul.f32 %v175, 0.2
  %v210 = vmul.f32 %v177, 0.2
  %v211 = vsel %vm179, %v140, %v195
  %v212 = vsel %vm180, %v142, %v196
  %v213 = vsel %vm181, %v145, %v197
  %v214 = vsel %vm182, %v147, %v198
  %v215 = vsel %vm183, %v150, %v199
  %v216 = vsel %vm184, %v152, %v200
  %v217 = vsel %vm185, %v155, %v201
  %v218 = vsel %vm186, %v157, %v202
  %v219 = vsel %vm187, %v160, %v203
  %v220 = vsel %vm188, %v162, %v204
  %v221 = vsel %vm189, %v165, %v205
  %v222 = vsel %vm190, %v167, %v206
  %v223 = vsel %vm191, %v170, %v207
  %v224 = vsel %vm192, %v172, %v208
  %v225 = vsel %vm193, %v175, %v209
  %v226 = vsel %vm194, %v177, %v210
  %v227 = vpack.c.bf16 %v211, %v211
  %v228 = vpack.c.bf16 %v212, %v212
  %v229 = vpack.c.bf16 %v213, %v213
  %v230 = vpack.c.bf16 %v214, %v214
  %v231 = vpack.c.bf16 %v215, %v215
  %v232 = vpack.c.bf16 %v216, %v216
  %v233 = vpack.c.bf16 %v217, %v217
  %v234 = vpack.c.bf16 %v218, %v218
  %v235 = vpack.c.bf16 %v219, %v219
  %v236 = vpack.c.bf16 %v220, %v220
  %v237 = vpack.c.bf16 %v221, %v221
  %v238 = vpack.c.bf16 %v222, %v222
  %v239 = vpack.c.bf16 %v223, %v223
  %v240 = vpack.c.bf16 %v224, %v224
  %v241 = vpack.c.bf16 %v225, %v225
  %v242 = vpack.c.bf16 %v226, %v226
  %v259 = vunpack.c.l.b16 %v227
  %v260 = vunpack.c.l.b16 %v228
  %v261 = vunpack.c.l.b16 %v229
  %v262 = vunpack.c.l.b16 %v230
  %v263 = vunpack.c.l.b16 %v231
  %v264 = vunpack.c.l.b16 %v232
  %v265 = vunpack.c.l.b16 %v233
  %v266 = vunpack.c.l.b16 %v234
  %v267 = vunpack.c.l.b16 %v235
  %v268 = vunpack.c.l.b16 %v236
  %v269 = vunpack.c.l.b16 %v237
  %v270 = vunpack.c.l.b16 %v238
  %v271 = vunpack.c.l.b16 %v239
  %v272 = vunpack.c.l.b16 %v240
  %v273 = vunpack.c.l.b16 %v241
  %v274 = vunpack.c.l.b16 %v242
  %v275 = vpack.c.b16 %v259, %v259
  %v276 = vpack.c.b16 %v260, %v260
  %v277 = vpack.c.b16 %v261, %v261
  %v278 = vpack.c.b16 %v262, %v262
  %v279 = vpack.c.b16 %v263, %v263
  %v280 = vpack.c.b16 %v264, %v264
  %v281 = vpack.c.b16 %v265, %v265
  %v282 = vpack.c.b16 %v266, %v266
  %v283 = vpack.c.b16 %v267, %v267
  %v284 = vpack.c.b16 %v268, %v268
  %v285 = vpack.c.b16 %v269, %v269
  %v286 = vpack.c.b16 %v270, %v270
  %v287 = vpack.c.b16 %v271, %v271
  %v288 = vpack.c.b16 %v272, %v272
  %v289 = vpack.c.b16 %v273, %v273
  %v290 = vpack.c.b16 %v274, %v274
  %v292 = vshrl.u32 %v275, 16
  %v294 = vrot.slane %v292, 7
  %v295 = vshll.u32 %v275, 16
  %v297 = vor.u32 %v294, %v295
  %v299 = vshrl.u32 %v276, 16
  %v301 = vrot.slane %v299, 7
  %v302 = vshll.u32 %v276, 16
  %v304 = vor.u32 %v301, %v302
  %v306 = vshrl.u32 %v277, 16
  %v308 = vrot.slane %v306, 7
  %v309 = vshll.u32 %v277, 16
  %v311 = vor.u32 %v308, %v309
  %v313 = vshrl.u32 %v278, 16
  %v315 = vrot.slane %v313, 7
  %v316 = vshll.u32 %v278, 16
  %v318 = vor.u32 %v315, %v316
  %v320 = vshrl.u32 %v279, 16
  %v322 = vrot.slane %v320, 7
  %v323 = vshll.u32 %v279, 16
  %v325 = vor.u32 %v322, %v323
  %v327 = vshrl.u32 %v280, 16
  %v329 = vrot.slane %v327, 7
  %v330 = vshll.u32 %v280, 16
  %v332 = vor.u32 %v329, %v330
  %v334 = vshrl.u32 %v281, 16
  %v336 = vrot.slane %v334, 7
  %v337 = vshll.u32 %v281, 16
  %v339 = vor.u32 %v336, %v337
  %v341 = vshrl.u32 %v282, 16
  %v343 = vrot.slane %v341, 7
  %v344 = vshll.u32 %v282, 16
  %v346 = vor.u32 %v343, %v344
  %v348 = vshrl.u32 %v283, 16
  %v350 = vrot.slane %v348, 7
  %v351 = vshll.u32 %v283, 16
  %v353 = vor.u32 %v350, %v351
  %v355 = vshrl.u32 %v284, 16
  %v357 = vrot.slane %v355, 7
  %v358 = vshll.u32 %v284, 16
  %v360 = vor.u32 %v357, %v358
  %v362 = vshrl.u32 %v285, 16
  %v364 = vrot.slane %v362, 7
  %v365 = vshll.u32 %v285, 16
  %v367 = vor.u32 %v364, %v365
  %v369 = vshrl.u32 %v286, 16
  %v371 = vrot.slane %v369, 7
  %v372 = vshll.u32 %v286, 16
  %v374 = vor.u32 %v371, %v372
  %v376 = vshrl.u32 %v287, 16
  %v378 = vrot.slane %v376, 7
  %v379 = vshll.u32 %v287, 16
  %v381 = vor.u32 %v378, %v379
  %v383 = vshrl.u32 %v288, 16
  %v385 = vrot.slane %v383, 7
  %v386 = vshll.u32 %v288, 16
  %v388 = vor.u32 %v385, %v386
  %v390 = vshrl.u32 %v289, 16
  %v392 = vrot.slane %v390, 7
  %v393 = vshll.u32 %v289, 16
  %v395 = vor.u32 %v392, %v393
  %v397 = vshrl.u32 %v290, 16
  %v399 = vrot.slane %v397, 7
  %v400 = vshll.u32 %v290, 16
  %v402 = vor.u32 %v399, %v400
  %vm419 = vcmask 1040384
  %vm420 = vsmask.f32 256
  %vm421 = vmand %vm419, %vm420
  %v422 = vsel %vm421, 0, %v297
  %v423 = vsel %vm421, 0, %v304
  %v424 = vsel %vm421, 0, %v311
  %v425 = vsel %vm421, 0, %v318
  %v426 = vsel %vm421, 0, %v325
  %v427 = vsel %vm421, 0, %v332
  %v428 = vsel %vm421, 0, %v339
  %v429 = vsel %vm421, 0, %v346
  %v430 = vsel %vm421, 0, %v353
  %v431 = vsel %vm421, 0, %v360
  %v432 = vsel %vm421, 0, %v367
  %v433 = vsel %vm421, 0, %v374
  %v434 = vsel %vm421, 0, %v381
  %v435 = vsel %vm421, 0, %v388
  %v436 = vsel %vm421, 0, %v395
  %v437 = vsel %vm421, 0, %v402
  %vm438 = vcmask 1044480
  %vm439 = vsmask.f32 4352
  %vm440 = vmand %vm438, %vm439
  %v441 = vsel %vm440, %v422, 0
  %v442 = vsel %vm440, %v423, 0
  %v443 = vsel %vm440, %v424, 0
  %v444 = vsel %vm440, %v425, 0
  %v445 = vsel %vm440, %v426, 0
  %v446 = vsel %vm440, %v427, 0
  %v447 = vsel %vm440, %v428, 0
  %v448 = vsel %vm440, %v429, 0
  %v449 = vsel %vm440, %v430, 0
  %v450 = vsel %vm440, %v431, 0
  %v451 = vsel %vm440, %v432, 0
  %v452 = vsel %vm440, %v433, 0
  %v453 = vsel %vm440, %v434, 0
  %v454 = vsel %vm440, %v435, 0
  %v455 = vsel %vm440, %v436, 0
  %v456 = vsel %vm440, %v437, 0
  %v458 = vshrl.u32 0, 16
  %v460 = vshll.u32 0, 16
  %v462 = vrot.slane %v460, 1
  %v463 = vor.u32 %v458, %v462
  %v465 = vshrl.u32 %v441, 16
  %v467 = vshll.u32 %v441, 16
  %v469 = vrot.slane %v467, 1
  %v470 = vor.u32 %v465, %v469
  %v472 = vshrl.u32 %v442, 16
  %v474 = vshll.u32 %v442, 16
  %v476 = vrot.slane %v474, 1
  %v477 = vor.u32 %v472, %v476
  %v479 = vshrl.u32 %v443, 16
  %v481 = vshll.u32 %v443, 16
  %v483 = vrot.slane %v481, 1
  %v484 = vor.u32 %v479, %v483
  %v486 = vshrl.u32 %v444, 16
  %v488 = vshll.u32 %v444, 16
  %v490 = vrot.slane %v488, 1
  %v491 = vor.u32 %v486, %v490
  %v493 = vshrl.u32 %v445, 16
  %v495 = vshll.u32 %v445, 16
  %v497 = vrot.slane %v495, 1
  %v498 = vor.u32 %v493, %v497
  %v500 = vshrl.u32 %v446, 16
  %v502 = vshll.u32 %v446, 16
  %v504 = vrot.slane %v502, 1
  %v505 = vor.u32 %v500, %v504
  %v507 = vshrl.u32 %v447, 16
  %v509 = vshll.u32 %v447, 16
  %v511 = vrot.slane %v509, 1
  %v512 = vor.u32 %v507, %v511
  %v514 = vshrl.u32 %v449, 16
  %v516 = vshll.u32 %v449, 16
  %v518 = vrot.slane %v516, 1
  %v519 = vor.u32 %v514, %v518
  %v521 = vshrl.u32 %v450, 16
  %v523 = vshll.u32 %v450, 16
  %v525 = vrot.slane %v523, 1
  %v526 = vor.u32 %v521, %v525
  %v528 = vshrl.u32 %v451, 16
  %v530 = vshll.u32 %v451, 16
  %v532 = vrot.slane %v530, 1
  %v533 = vor.u32 %v528, %v532
  %v535 = vshrl.u32 %v452, 16
  %v537 = vshll.u32 %v452, 16
  %v539 = vrot.slane %v537, 1
  %v540 = vor.u32 %v535, %v539
  %v542 = vshrl.u32 %v453, 16
  %v544 = vshll.u32 %v453, 16
  %v546 = vrot.slane %v544, 1
  %v547 = vor.u32 %v542, %v546
  %v549 = vshrl.u32 %v454, 16
  %v551 = vshll.u32 %v454, 16
  %v553 = vrot.slane %v551, 1
  %v554 = vor.u32 %v549, %v553
  %v556 = vshrl.u32 %v455, 16
  %v558 = vshll.u32 %v455, 16
  %v560 = vrot.slane %v558, 1
  %v561 = vor.u32 %v556, %v560
  %562 = vrot.lane.b32.xlu0 %v463, 64
  %v563 = vpop.permute.xlu0 %562
  %564 = vrot.lane.b32.xlu0 %v470, 64
  %v565 = vpop.permute.xlu0 %564
  %566 = vrot.lane.b32.xlu0 %v477, 64
  %v567 = vpop.permute.xlu0 %566
  %568 = vrot.lane.b32.xlu0 %v484, 64
  %v569 = vpop.permute.xlu0 %568
  %570 = vrot.lane.b32.xlu0 %v491, 64
  %v571 = vpop.permute.xlu0 %570
  %572 = vrot.lane.b32.xlu0 %v498, 64
  %v573 = vpop.permute.xlu0 %572
  %574 = vrot.lane.b32.xlu0 %v505, 64
  %v575 = vpop.permute.xlu0 %574
  %576 = vrot.lane.b32.xlu0 %v512, 64
  %v577 = vpop.permute.xlu0 %576
  %578 = vrot.lane.b32.xlu0 %v519, 64
  %v579 = vpop.permute.xlu0 %578
  %580 = vrot.lane.b32.xlu0 %v526, 64
  %v581 = vpop.permute.xlu0 %580
  %582 = vrot.lane.b32.xlu0 %v533, 64
  %v583 = vpop.permute.xlu0 %582
  %584 = vrot.lane.b32.xlu0 %v540, 64
  %v585 = vpop.permute.xlu0 %584
  %586 = vrot.lane.b32.xlu0 %v547, 64
  %v587 = vpop.permute.xlu0 %586
  %588 = vrot.lane.b32.xlu0 %v554, 64
  %v589 = vpop.permute.xlu0 %588
  %590 = vrot.lane.b32.xlu0 %v561, 64
  %v591 = vpop.permute.xlu0 %590
  %v607 = vrot.slane 0, 1
  %v608 = vrot.slane %v441, 1
  %v609 = vrot.slane %v442, 1
  %v610 = vrot.slane %v443, 1
  %v611 = vrot.slane %v444, 1
  %v612 = vrot.slane %v445, 1
  %v613 = vrot.slane %v446, 1
  %v614 = vrot.slane %v447, 1
  %v615 = vrot.slane %v449, 1
  %v616 = vrot.slane %v450, 1
  %v617 = vrot.slane %v451, 1
  %v618 = vrot.slane %v452, 1
  %v619 = vrot.slane %v453, 1
  %v620 = vrot.slane %v454, 1
  %v621 = vrot.slane %v455, 1
  %624 = vrot.lane.b32.xlu0 %v441, 64
  %v625 = vpop.permute.xlu0 %624
  %626 = vrot.lane.b32.xlu0 %v442, 64
  %v627 = vpop.permute.xlu0 %626
  %628 = vrot.lane.b32.xlu0 %v443, 64
  %v629 = vpop.permute.xlu0 %628
  %630 = vrot.lane.b32.xlu0 %v444, 64
  %v631 = vpop.permute.xlu0 %630
  %632 = vrot.lane.b32.xlu0 %v445, 64
  %v633 = vpop.permute.xlu0 %632
  %634 = vrot.lane.b32.xlu0 %v446, 64
  %v635 = vpop.permute.xlu0 %634
  %636 = vrot.lane.b32.xlu0 %v447, 64
  %v637 = vpop.permute.xlu0 %636
  %638 = vrot.lane.b32.xlu0 %v448, 64
  %v639 = vpop.permute.xlu0 %638
  %640 = vrot.lane.b32.xlu0 %v449, 64
  %v641 = vpop.permute.xlu0 %640
  %642 = vrot.lane.b32.xlu0 %v450, 64
  %v643 = vpop.permute.xlu0 %642
  %644 = vrot.lane.b32.xlu0 %v451, 64
  %v645 = vpop.permute.xlu0 %644
  %646 = vrot.lane.b32.xlu0 %v452, 64
  %v647 = vpop.permute.xlu0 %646
  %648 = vrot.lane.b32.xlu0 %v453, 64
  %v649 = vpop.permute.xlu0 %648
  %650 = vrot.lane.b32.xlu0 %v454, 64
  %v651 = vpop.permute.xlu0 %650
  %652 = vrot.lane.b32.xlu0 %v455, 64
  %v653 = vpop.permute.xlu0 %652
  %654 = vrot.lane.b32.xlu0 %v456, 64
  %v655 = vpop.permute.xlu0 %654
  %v657 = vshrl.u32 %v448, 16
  %v659 = vshll.u32 %v448, 16
  %v661 = vrot.slane %v659, 1
  %v662 = vor.u32 %v657, %v661
  %v664 = vshrl.u32 %v456, 16
  %v666 = vshll.u32 %v456, 16
  %v668 = vrot.slane %v666, 1
  %v669 = vor.u32 %v664, %v668
  %v670 = vrot.slane %v448, 1
  %v671 = vrot.slane %v456, 1
  %672 = vrot.lane.b32.xlu0 %v608, 64
  %v673 = vpop.permute.xlu0 %672
  %674 = vrot.lane.b32.xlu0 %v609, 64
  %v675 = vpop.permute.xlu0 %674
  %676 = vrot.lane.b32.xlu0 %v610, 64
  %v677 = vpop.permute.xlu0 %676
  %678 = vrot.lane.b32.xlu0 %v611, 64
  %v679 = vpop.permute.xlu0 %678
  %680 = vrot.lane.b32.xlu0 %v612, 64
  %v681 = vpop.permute.xlu0 %680
  %682 = vrot.lane.b32.xlu0 %v613, 64
  %v683 = vpop.permute.xlu0 %682
  %684 = vrot.lane.b32.xlu0 %v614, 64
  %v685 = vpop.permute.xlu0 %684
  %686 = vrot.lane.b32.xlu0 %v670, 64
  %v687 = vpop.permute.xlu0 %686
  %688 = vrot.lane.b32.xlu0 %v615, 64
  %v689 = vpop.permute.xlu0 %688
  %690 = vrot.lane.b32.xlu0 %v616, 64
  %v691 = vpop.permute.xlu0 %690
  %692 = vrot.lane.b32.xlu0 %v617, 64
  %v693 = vpop.permute.xlu0 %692
  %694 = vrot.lane.b32.xlu0 %v618, 64
  %v695 = vpop.permute.xlu0 %694
  %696 = vrot.lane.b32.xlu0 %v619, 64
  %v697 = vpop.permute.xlu0 %696
  %698 = vrot.lane.b32.xlu0 %v620, 64
  %v699 = vpop.permute.xlu0 %698
  %700 = vrot.lane.b32.xlu0 %v621, 64
  %v701 = vpop.permute.xlu0 %700
  %702 = vrot.lane.b32.xlu0 %v671, 64
  %v703 = vpop.permute.xlu0 %702
  %704 = vrot.lane.b32.xlu0 %v662, 64
  %v705 = vpop.permute.xlu0 %704
  %706 = vrot.lane.b32.xlu0 %v669, 64
  %v707 = vpop.permute.xlu0 %706
  %vm708 = vcmask 523264
  %v710 = vsel %vm708, 0, %v563
  %v712 = vsel %vm708, %v441, %v565
  %v714 = vsel %vm708, %v442, %v567
  %v716 = vsel %vm708, %v443, %v569
  %v718 = vsel %vm708, %v444, %v571
  %v720 = vsel %vm708, %v445, %v573
  %v722 = vsel %vm708, %v446, %v575
  %v724 = vsel %vm708, %v447, %v577
  %v726 = vsel %vm708, %v449, %v579
  %v728 = vsel %vm708, %v450, %v581
  %v730 = vsel %vm708, %v451, %v583
  %v732 = vsel %vm708, %v452, %v585
  %v734 = vsel %vm708, %v453, %v587
  %v736 = vsel %vm708, %v454, %v589
  %v738 = vsel %vm708, %v455, %v591
  %v741 = vsel %vm708, %v607, %v625
  %v744 = vsel %vm708, %v608, %v627
  %v747 = vsel %vm708, %v609, %v629
  %v750 = vsel %vm708, %v610, %v631
  %v753 = vsel %vm708, %v611, %v633
  %v756 = vsel %vm708, %v612, %v635
  %v759 = vsel %vm708, %v613, %v637
  %v762 = vsel %vm708, %v614, %v639
  %v764 = vsel %vm708, %v607, %v641
  %v767 = vsel %vm708, %v615, %v643
  %v770 = vsel %vm708, %v616, %v645
  %v773 = vsel %vm708, %v617, %v647
  %v776 = vsel %vm708, %v618, %v649
  %v779 = vsel %vm708, %v619, %v651
  %v782 = vsel %vm708, %v620, %v653
  %v785 = vsel %vm708, %v621, %v655
  %v788 = vsel %vm708, %v470, %v673
  %v791 = vsel %vm708, %v477, %v675
  %v794 = vsel %vm708, %v484, %v677
  %v797 = vsel %vm708, %v491, %v679
  %v800 = vsel %vm708, %v498, %v681
  %v803 = vsel %vm708, %v505, %v683
  %v806 = vsel %vm708, %v512, %v685
  %v809 = vsel %vm708, %v662, %v687
  %v812 = vsel %vm708, %v519, %v689
  %v815 = vsel %vm708, %v526, %v691
  %v818 = vsel %vm708, %v533, %v693
  %v821 = vsel %vm708, %v540, %v695
  %v824 = vsel %vm708, %v547, %v697
  %v827 = vsel %vm708, %v554, %v699
  %v830 = vsel %vm708, %v561, %v701
  %v833 = vsel %vm708, %v669, %v703
  %v835 = vsel %vm708, %v448, %v705
  %v837 = vsel %vm708, %v456, %v707
  %v887 = vunpack.c.l.b16 %v710
  %v888 = vunpack.c.l.b16 %v741
  %v889 = vunpack.c.l.b16 %v788
  %v890 = vunpack.c.l.b16 %v714
  %v891 = vunpack.c.l.b16 %v609
  %v892 = vunpack.c.l.b16 %v712
  %v893 = vunpack.c.l.b16 %v744
  %v894 = vunpack.c.l.b16 %v791
  %v895 = vunpack.c.l.b16 %v716
  %v896 = vunpack.c.l.b16 %v610
  %v897 = vunpack.c.l.b16 %v747
  %v898 = vunpack.c.l.b16 %v794
  %v899 = vunpack.c.l.b16 %v718
  %v900 = vunpack.c.l.b16 %v611
  %v901 = vunpack.c.l.b16 %v750
  %v902 = vunpack.c.l.b16 %v797
  %v903 = vunpack.c.l.b16 %v720
  %v904 = vunpack.c.l.b16 %v612
  %v905 = vunpack.c.l.b16 %v753
  %v906 = vunpack.c.l.b16 %v800
  %v907 = vunpack.c.l.b16 %v722
  %v908 = vunpack.c.l.b16 %v613
  %v909 = vunpack.c.l.b16 %v756
  %v910 = vunpack.c.l.b16 %v803
  %v911 = vunpack.c.l.b16 %v724
  %v912 = vunpack.c.l.b16 %v614
  %v913 = vunpack.c.l.b16 %v759
  %v914 = vunpack.c.l.b16 %v806
  %v915 = vunpack.c.l.b16 %v835
  %v916 = vunpack.c.l.b16 %v670
  %v917 = vunpack.c.l.b16 %v762
  %v918 = vunpack.c.l.b16 %v809
  %v919 = vunpack.c.l.b16 %v607
  %v920 = vunpack.c.l.b16 %v764
  %v921 = vunpack.c.l.b16 %v812
  %v922 = vunpack.c.l.b16 %v728
  %v923 = vunpack.c.l.b16 %v616
  %v924 = vunpack.c.l.b16 %v726
  %v925 = vunpack.c.l.b16 %v767
  %v926 = vunpack.c.l.b16 %v815
  %v927 = vunpack.c.l.b16 %v730
  %v928 = vunpack.c.l.b16 %v617
  %v929 = vunpack.c.l.b16 %v770
  %v930 = vunpack.c.l.b16 %v818
  %v931 = vunpack.c.l.b16 %v732
  %v932 = vunpack.c.l.b16 %v618
  %v933 = vunpack.c.l.b16 %v773
  %v934 = vunpack.c.l.b16 %v821
  %v935 = vunpack.c.l.b16 %v734
  %v936 = vunpack.c.l.b16 %v619
  %v937 = vunpack.c.l.b16 %v776
  %v938 = vunpack.c.l.b16 %v824
  %v939 = vunpack.c.l.b16 %v736
  %v940 = vunpack.c.l.b16 %v620
  %v941 = vunpack.c.l.b16 %v779
  %v942 = vunpack.c.l.b16 %v827
  %v943 = vunpack.c.l.b16 %v738
  %v944 = vunpack.c.l.b16 %v621
  %v945 = vunpack.c.l.b16 %v782
  %v946 = vunpack.c.l.b16 %v830
  %v947 = vunpack.c.l.b16 %v837
  %v948 = vunpack.c.l.b16 %v671
  %v949 = vunpack.c.l.b16 %v785
  %v950 = vunpack.c.l.b16 %v833
  %v951 = vld [vmem:[%s3] sm:$0xf]
  %v952 = vld [vmem:[%s3 + $0x4] sm:$0xf]
  %v953 = vld [vmem:[%s3 + $0x8] sm:$0xf]
  %v954 = vld [vmem:[%s3 + $0xc] sm:$0xf]
  %v955 = vld [vmem:[%s3 + $0x10] sm:$0xf]
  %v956 = vld [vmem:[%s3 + $0x14] sm:$0xf]
  %v957 = vld [vmem:[%s3 + $0x18] sm:$0xf]
  %v958 = vld [vmem:[%s3 + $0x1c] sm:$0xf]
  %v959 = vld [vmem:[%s3 + $0x20] sm:$0xf]
  %v960 = vld [vmem:[%s3 + $0x24] sm:$0xf]
  %v961 = vld [vmem:[%s3 + $0x28] sm:$0xf]
  %v962 = vld [vmem:[%s3 + $0x2c] sm:$0xf]
  %v963 = vld [vmem:[%s3 + $0x30] sm:$0xf]
  %v964 = vld [vmem:[%s3 + $0x34] sm:$0xf]
  %v965 = vld [vmem:[%s3 + $0x38] sm:$0xf]
  %v966 = vld [vmem:[%s3 + $0x3c] sm:$0xf]
  %v967 = vld [vmem:[%s3 + $0x40] sm:$0xf]
  %v968 = vld [vmem:[%s3 + $0x44] sm:$0xf]
  %v969 = vld [vmem:[%s3 + $0x48] sm:$0xf]
  %v970 = vld [vmem:[%s3 + $0x4c] sm:$0xf]
  %v971 = vld [vmem:[%s3 + $0x50] sm:$0xf]
  %v972 = vld [vmem:[%s3 + $0x54] sm:$0xf]
  %v973 = vld [vmem:[%s3 + $0x58] sm:$0xf]
  %v974 = vld [vmem:[%s3 + $0x5c] sm:$0xf]
  %v975 = vld [vmem:[%s3 + $0x60] sm:$0xf]
  %v976 = vld [vmem:[%s3 + $0x64] sm:$0xf]
  %v977 = vld [vmem:[%s3 + $0x68] sm:$0xf]
  %v978 = vld [vmem:[%s3 + $0x6c] sm:$0xf]
  %v979 = vld [vmem:[%s3 + $0x70] sm:$0xf]
  %v980 = vld [vmem:[%s3 + $0x74] sm:$0xf]
  %v981 = vld [vmem:[%s3 + $0x78] sm:$0xf]
  %v982 = vld [vmem:[%s3 + $0x7c] sm:$0xf]
  %v983 = vld [vmem:[%s3 + $0x80] sm:$0xf]
  %v984 = vld [vmem:[%s3 + $0x84] sm:$0xf]
  %v985 = vld [vmem:[%s3 + $0x88] sm:$0xf]
  %v986 = vld [vmem:[%s3 + $0x8c] sm:$0xf]
  %v987 = vld [vmem:[%s3 + $0x90] sm:$0xf]
  %v988 = vld [vmem:[%s3 + $0x94] sm:$0xf]
  %v989 = vld [vmem:[%s3 + $0x98] sm:$0xf]
  %v990 = vld [vmem:[%s3 + $0x9c] sm:$0xf]
  %v991 = vld [vmem:[%s3 + $0xa0] sm:$0xf]
  %v992 = vld [vmem:[%s3 + $0xa4] sm:$0xf]
  %v993 = vld [vmem:[%s3 + $0xa8] sm:$0xf]
  %v994 = vld [vmem:[%s3 + $0xac] sm:$0xf]
  %v995 = vld [vmem:[%s3 + $0xb0] sm:$0xf]
  %v996 = vld [vmem:[%s3 + $0xb4] sm:$0xf]
  %v997 = vld [vmem:[%s3 + $0xb8] sm:$0xf]
  %v998 = vld [vmem:[%s3 + $0xbc] sm:$0xf]
  %v999 = vld [vmem:[%s3 + $0xc0] sm:$0xf]
  %v1000 = vld [vmem:[%s3 + $0xc4] sm:$0xf]
  %v1001 = vld [vmem:[%s3 + $0xc8] sm:$0xf]
  %v1002 = vld [vmem:[%s3 + $0xcc] sm:$0xf]
  %v1003 = vld [vmem:[%s3 + $0xd0] sm:$0xf]
  %v1004 = vld [vmem:[%s3 + $0xd4] sm:$0xf]
  %v1005 = vld [vmem:[%s3 + $0xd8] sm:$0xf]
  %v1006 = vld [vmem:[%s3 + $0xdc] sm:$0xf]
  %v1007 = vld [vmem:[%s3 + $0xe0] sm:$0xf]
  %v1008 = vld [vmem:[%s3 + $0xe4] sm:$0xf]
  %v1009 = vld [vmem:[%s3 + $0xe8] sm:$0xf]
  %v1010 = vld [vmem:[%s3 + $0xec] sm:$0xf]
  %v1011 = vld [vmem:[%s3 + $0xf0] sm:$0xf]
  %v1012 = vld [vmem:[%s3 + $0xf4] sm:$0xf]
  %v1013 = vld [vmem:[%s3 + $0xf8] sm:$0xf]
  %v1014 = vld [vmem:[%s3 + $0xfc] sm:$0xf]
  %v1015 = vld [vmem:[%s3 + $0x100] sm:$0xf]
  %v1016 = vld [vmem:[%s3 + $0x104] sm:$0xf]
  %v1017 = vld [vmem:[%s3 + $0x108] sm:$0xf]
  %v1018 = vld [vmem:[%s3 + $0x10c] sm:$0xf]
  %v1019 = vld [vmem:[%s3 + $0x110] sm:$0xf]
  %v1020 = vld [vmem:[%s3 + $0x114] sm:$0xf]
  %v1021 = vld [vmem:[%s3 + $0x118] sm:$0xf]
  %v1022 = vld [vmem:[%s3 + $0x11c] sm:$0xf]
  %v1023 = vld [vmem:[%s4] sm:$0x1]
  %v1025 = vperm.slane %v1023, 0
  %v1027 = vpack.c.b16 %v892, %v887
  %v1028 = vpack.c.b16 %v893, %v888
  %v1029 = vpack.c.b16 %v894, %v889
  %v1030 = vpack.c.b16 %v895, %v890
  %v1031 = vpack.c.b16 %v896, %v891
  %v1032 = vpack.c.b16 %v901, %v897
  %v1033 = vpack.c.b16 %v902, %v898
  %v1034 = vpack.c.b16 %v903, %v899
  %v1035 = vpack.c.b16 %v904, %v900
  %v1036 = vpack.c.b16 %v909, %v905
  %v1037 = vpack.c.b16 %v910, %v906
  %v1038 = vpack.c.b16 %v911, %v907
  %v1039 = vpack.c.b16 %v912, %v908
  %v1040 = vpack.c.b16 %v917, %v913
  %v1041 = vpack.c.b16 %v918, %v914
  %v1042 = vpack.c.b16 %v887, %v915
  %v1043 = vpack.c.b16 %v919, %v916
  %v1044 = vpack.c.b16 %v924, %v887
  %v1045 = vpack.c.b16 %v925, %v920
  %v1046 = vpack.c.b16 %v926, %v921
  %v1047 = vpack.c.b16 %v927, %v922
  %v1048 = vpack.c.b16 %v928, %v923
  %v1049 = vpack.c.b16 %v933, %v929
  %v1050 = vpack.c.b16 %v934, %v930
  %v1051 = vpack.c.b16 %v935, %v931
  %v1052 = vpack.c.b16 %v936, %v932
  %v1053 = vpack.c.b16 %v941, %v937
  %v1054 = vpack.c.b16 %v942, %v938
  %v1055 = vpack.c.b16 %v943, %v939
  %v1056 = vpack.c.b16 %v944, %v940
  %v1057 = vpack.c.b16 %v949, %v945
  %v1058 = vpack.c.b16 %v950, %v946
  %v1059 = vpack.c.b16 %v887, %v947
  %v1060 = vpack.c.b16 %v919, %v948
  %v1159 = vunpack.c.l.b16 %v951
  %v1160 = vunpack.c.l.b16 %v952
  %v1161 = vunpack.c.l.b16 %v953
  %v1162 = vunpack.c.l.b16 %v954
  %v1163 = vunpack.c.l.b16 %v955
  %v1164 = vunpack.c.l.b16 %v956
  %v1165 = vunpack.c.l.b16 %v957
  %v1166 = vunpack.c.l.b16 %v958
  %v1167 = vunpack.c.l.b16 %v959
  %v1168 = vunpack.c.l.b16 %v960
  %v1169 = vunpack.c.l.b16 %v961
  %v1170 = vunpack.c.l.b16 %v962
  %v1171 = vunpack.c.l.b16 %v963
  %v1172 = vunpack.c.l.b16 %v964
  %v1173 = vunpack.c.l.b16 %v965
  %v1174 = vunpack.c.l.b16 %v966
  %v1175 = vunpack.c.l.b16 %v967
  %v1176 = vunpack.c.l.b16 %v968
  %v1177 = vunpack.c.l.b16 %v969
  %v1178 = vunpack.c.l.b16 %v970
  %v1179 = vunpack.c.l.b16 %v971
  %v1180 = vunpack.c.l.b16 %v972
  %v1181 = vunpack.c.l.b16 %v973
  %v1182 = vunpack.c.l.b16 %v974
  %v1183 = vunpack.c.l.b16 %v975
  %v1184 = vunpack.c.l.b16 %v976
  %v1185 = vunpack.c.l.b16 %v977
  %v1186 = vunpack.c.l.b16 %v978
  %v1187 = vunpack.c.l.b16 %v979
  %v1188 = vunpack.c.l.b16 %v980
  %v1189 = vunpack.c.l.b16 %v981
  %v1190 = vunpack.c.l.b16 %v982
  %v1191 = vunpack.c.l.b16 %v983
  %v1192 = vunpack.c.l.b16 %v984
  %v1193 = vunpack.c.l.b16 %v985
  %v1194 = vunpack.c.l.b16 %v986
  %v1195 = vunpack.c.l.b16 %v987
  %v1196 = vunpack.c.l.b16 %v988
  %v1197 = vunpack.c.l.b16 %v989
  %v1198 = vunpack.c.l.b16 %v990
  %v1199 = vunpack.c.l.b16 %v991
  %v1200 = vunpack.c.l.b16 %v992
  %v1201 = vunpack.c.l.b16 %v993
  %v1202 = vunpack.c.l.b16 %v994
  %v1203 = vunpack.c.l.b16 %v995
  %v1204 = vunpack.c.l.b16 %v996
  %v1205 = vunpack.c.l.b16 %v997
  %v1206 = vunpack.c.l.b16 %v998
  %v1207 = vunpack.c.l.b16 %v999
  %v1208 = vunpack.c.l.b16 %v1000
  %v1209 = vunpack.c.l.b16 %v1001
  %v1210 = vunpack.c.l.b16 %v1002
  %v1211 = vunpack.c.l.b16 %v1003
  %v1212 = vunpack.c.l.b16 %v1004
  %v1213 = vunpack.c.l.b16 %v1005
  %v1214 = vunpack.c.l.b16 %v1006
  %v1215 = vunpack.c.l.b16 %v1007
  %v1216 = vunpack.c.l.b16 %v1008
  %v1217 = vunpack.c.l.b16 %v1009
  %v1218 = vunpack.c.l.b16 %v1010
  %v1219 = vunpack.c.l.b16 %v1011
  %v1220 = vunpack.c.l.b16 %v1012
  %v1221 = vunpack.c.l.b16 %v1013
  %v1222 = vunpack.c.l.b16 %v1014
  %v1223 = vunpack.c.l.b16 %v1015
  %v1224 = vunpack.c.l.b16 %v1016
  %v1225 = vunpack.c.l.b16 %v1017
  %v1226 = vunpack.c.l.b16 %v1018
  %v1227 = vunpack.c.l.b16 %v1019
  %v1228 = vunpack.c.l.b16 %v1020
  %v1229 = vunpack.c.l.b16 %v1021
  %v1230 = vunpack.c.l.b16 %v1022
  %v1231 = vpack.c.b16 %v1160, %v1159
  %v1232 = vpack.c.b16 %v1162, %v1161
  %v1233 = vpack.c.b16 %v1164, %v1163
  %v1234 = vpack.c.b16 %v1166, %v1165
  %v1235 = vpack.c.b16 %v1168, %v1167
  %v1236 = vpack.c.b16 %v1170, %v1169
  %v1237 = vpack.c.b16 %v1172, %v1171
  %v1238 = vpack.c.b16 %v1174, %v1173
  %v1239 = vpack.c.b16 %v1176, %v1175
  %v1240 = vpack.c.b16 %v1178, %v1177
  %v1241 = vpack.c.b16 %v1180, %v1179
  %v1242 = vpack.c.b16 %v1182, %v1181
  %v1243 = vpack.c.b16 %v1184, %v1183
  %v1244 = vpack.c.b16 %v1186, %v1185
  %v1245 = vpack.c.b16 %v1188, %v1187
  %v1246 = vpack.c.b16 %v1190, %v1189
  %v1247 = vpack.c.b16 %v1192, %v1191
  %v1248 = vpack.c.b16 %v1194, %v1193
  %v1249 = vpack.c.b16 %v1196, %v1195
  %v1250 = vpack.c.b16 %v1198, %v1197
  %v1251 = vpack.c.b16 %v1200, %v1199
  %v1252 = vpack.c.b16 %v1202, %v1201
  %v1253 = vpack.c.b16 %v1204, %v1203
  %v1254 = vpack.c.b16 %v1206, %v1205
  %v1255 = vpack.c.b16 %v1208, %v1207
  %v1256 = vpack.c.b16 %v1210, %v1209
  %v1257 = vpack.c.b16 %v1212, %v1211
  %v1258 = vpack.c.b16 %v1214, %v1213
  %v1259 = vpack.c.b16 %v1216, %v1215
  %v1260 = vpack.c.b16 %v1218, %v1217
  %v1261 = vpack.c.b16 %v1220, %v1219
  %v1262 = vpack.c.b16 %v1222, %v1221
  %v1263 = vpack.c.b16 %v1224, %v1223
  %v1264 = vpack.c.b16 %v1226, %v1225
  %v1265 = vpack.c.b16 %v1228, %v1227
  %v1266 = vpack.c.b16 %v1230, %v1229
  %v1304 = vsel %vm708, %v1031, 0
  %v1307 = vsel %vm708, %v1035, 0
  %v1310 = vsel %vm708, %v1039, 0
  %v1313 = vsel %vm708, %v1043, 0
  %v1316 = vsel %vm708, %v1048, 0
  %v1319 = vsel %vm708, %v1052, 0
  %v1322 = vsel %vm708, %v1056, 0
  %v1325 = vsel %vm708, %v1060, 0
  %1327 = vmatpush.bf16.msra.mxu0 %v1238
  %1328 = vmatpush.bf16.msra.mxu0 %v1237
  %1329 = vmatpush.bf16.msra.mxu0 %v1236
  %1330 = vmatpush.bf16.msra.mxu0 %v1235
  %1331 = vmatpush.bf16.msra.mxu0 %v1234
  %1332 = vmatpush.bf16.msra.mxu0 %v1233
  %1333 = vmatpush.bf16.msra.mxu0 %v1232
  %1334 = vmatpush.bf16.msra.mxu0 %v1231
  %1335 = vmatmul.bf16.gmra.mxu0 %v1027
  %v1336 = vpop.f32.mrf.mxu0
  %v1337 = vadd.f32 %v1025, %v1336
  %v1338 = vpop.f32.mrf.mxu0
  %v1339 = vadd.f32 %v1025, %v1338
  %1340 = vmatmul.bf16.gmra.mxu0 %v1030
  %v1341 = vpop.f32.mrf.mxu0
  %v1342 = vadd.f32 %v1025, %v1341
  %v1343 = vpop.f32.mrf.mxu0
  %v1344 = vadd.f32 %v1025, %v1343
  %1345 = vmatmul.bf16.gmra.mxu0 %v1034
  %v1346 = vpop.f32.mrf.mxu0
  %v1347 = vadd.f32 %v1025, %v1346
  %v1348 = vpop.f32.mrf.mxu0
  %v1349 = vadd.f32 %v1025, %v1348
  %1350 = vmatmul.bf16.gmra.mxu0 %v1038
  %v1351 = vpop.f32.mrf.mxu0
  %v1352 = vadd.f32 %v1025, %v1351
  %v1353 = vpop.f32.mrf.mxu0
  %v1354 = vadd.f32 %v1025, %v1353
  %1355 = vmatmul.bf16.gmra.mxu0 %v1044
  %v1356 = vpop.f32.mrf.mxu0
  %v1357 = vadd.f32 %v1025, %v1356
  %v1358 = vpop.f32.mrf.mxu0
  %v1359 = vadd.f32 %v1025, %v1358
  %1360 = vmatmul.bf16.gmra.mxu0 %v1047
  %v1361 = vpop.f32.mrf.mxu0
  %v1362 = vadd.f32 %v1025, %v1361
  %v1363 = vpop.f32.mrf.mxu0
  %v1364 = vadd.f32 %v1025, %v1363
  %1365 = vmatmul.bf16.gmra.mxu0 %v1051
  %v1366 = vpop.f32.mrf.mxu0
  %v1367 = vadd.f32 %v1025, %v1366
  %v1368 = vpop.f32.mrf.mxu0
  %v1369 = vadd.f32 %v1025, %v1368
  %1370 = vmatmul.bf16.gmra.mxu0 %v1055
  %v1371 = vpop.f32.mrf.mxu0
  %v1372 = vadd.f32 %v1025, %v1371
  %v1373 = vpop.f32.mrf.mxu0
  %v1374 = vadd.f32 %v1025, %v1373
  %1375 = vdwg.mxu0
  %1376 = vmatpush.bf16.msra.mxu0 %v1246
  %1377 = vmatpush.bf16.msra.mxu0 %v1245
  %1378 = vmatpush.bf16.msra.mxu0 %v1244
  %1379 = vmatpush.bf16.msra.mxu0 %v1243
  %1380 = vmatpush.bf16.msra.mxu0 %v1242
  %1381 = vmatpush.bf16.msra.mxu0 %v1241
  %1382 = vmatpush.bf16.msra.mxu0 %v1240
  %1383 = vmatpush.bf16.msra.mxu0 %v1239
  %1384 = vmatmul.bf16.gmra.mxu0 %v1028
  %v1385 = vpop.f32.mrf.mxu0
  %v1386 = vadd.f32 %v1337, %v1385
  %v1387 = vpop.f32.mrf.mxu0
  %v1388 = vadd.f32 %v1339, %v1387
  %1389 = vmatmul.bf16.gmra.mxu0 %v1032
  %v1390 = vpop.f32.mrf.mxu0
  %v1391 = vadd.f32 %v1342, %v1390
  %v1392 = vpop.f32.mrf.mxu0
  %v1393 = vadd.f32 %v1344, %v1392
  %1394 = vmatmul.bf16.gmra.mxu0 %v1036
  %v1395 = vpop.f32.mrf.mxu0
  %v1396 = vadd.f32 %v1347, %v1395
  %v1397 = vpop.f32.mrf.mxu0
  %v1398 = vadd.f32 %v1349, %v1397
  %1399 = vmatmul.bf16.gmra.mxu0 %v1040
  %v1400 = vpop.f32.mrf.mxu0
  %v1401 = vadd.f32 %v1352, %v1400
  %v1402 = vpop.f32.mrf.mxu0
  %v1403 = vadd.f32 %v1354, %v1402
  %1404 = vmatmul.bf16.gmra.mxu0 %v1045
  %v1405 = vpop.f32.mrf.mxu0
  %v1406 = vadd.f32 %v1357, %v1405
  %v1407 = vpop.f32.mrf.mxu0
  %v1408 = vadd.f32 %v1359, %v1407
  %1409 = vmatmul.bf16.gmra.mxu0 %v1049
  %v1410 = vpop.f32.mrf.mxu0
  %v1411 = vadd.f32 %v1362, %v1410
  %v1412 = vpop.f32.mrf.mxu0
  %v1413 = vadd.f32 %v1364, %v1412
  %1414 = vmatmul.bf16.gmra.mxu0 %v1053
  %v1415 = vpop.f32.mrf.mxu0
  %v1416 = vadd.f32 %v1367, %v1415
  %v1417 = vpop.f32.mrf.mxu0
  %v1418 = vadd.f32 %v1369, %v1417
  %1419 = vmatmul.bf16.gmra.mxu0 %v1057
  %v1420 = vpop.f32.mrf.mxu0
  %v1421 = vadd.f32 %v1372, %v1420
  %v1422 = vpop.f32.mrf.mxu0
  %v1423 = vadd.f32 %v1374, %v1422
  %1424 = vdwg.mxu0
  %1425 = vmatpush.bf16.msra.mxu0 %v1254
  %1426 = vmatpush.bf16.msra.mxu0 %v1253
  %1427 = vmatpush.bf16.msra.mxu0 %v1252
  %1428 = vmatpush.bf16.msra.mxu0 %v1251
  %1429 = vmatpush.bf16.msra.mxu0 %v1250
  %1430 = vmatpush.bf16.msra.mxu0 %v1249
  %1431 = vmatpush.bf16.msra.mxu0 %v1248
  %1432 = vmatpush.bf16.msra.mxu0 %v1247
  %1433 = vmatmul.bf16.gmra.mxu0 %v1029
  %v1434 = vpop.f32.mrf.mxu0
  %v1435 = vadd.f32 %v1386, %v1434
  %v1436 = vpop.f32.mrf.mxu0
  %v1437 = vadd.f32 %v1388, %v1436
  %1438 = vmatmul.bf16.gmra.mxu0 %v1033
  %v1439 = vpop.f32.mrf.mxu0
  %v1440 = vadd.f32 %v1391, %v1439
  %v1441 = vpop.f32.mrf.mxu0
  %v1442 = vadd.f32 %v1393, %v1441
  %1443 = vmatmul.bf16.gmra.mxu0 %v1037
  %v1444 = vpop.f32.mrf.mxu0
  %v1445 = vadd.f32 %v1396, %v1444
  %v1446 = vpop.f32.mrf.mxu0
  %v1447 = vadd.f32 %v1398, %v1446
  %1448 = vmatmul.bf16.gmra.mxu0 %v1041
  %v1449 = vpop.f32.mrf.mxu0
  %v1450 = vadd.f32 %v1401, %v1449
  %v1451 = vpop.f32.mrf.mxu0
  %v1452 = vadd.f32 %v1403, %v1451
  %1453 = vmatmul.bf16.gmra.mxu0 %v1046
  %v1454 = vpop.f32.mrf.mxu0
  %v1455 = vadd.f32 %v1406, %v1454
  %v1456 = vpop.f32.mrf.mxu0
  %v1457 = vadd.f32 %v1408, %v1456
  %1458 = vmatmul.bf16.gmra.mxu0 %v1050
  %v1459 = vpop.f32.mrf.mxu0
  %v1460 = vadd.f32 %v1411, %v1459
  %v1461 = vpop.f32.mrf.mxu0
  %v1462 = vadd.f32 %v1413, %v1461
  %1463 = vmatmul.bf16.gmra.mxu0 %v1054
  %v1464 = vpop.f32.mrf.mxu0
  %v1465 = vadd.f32 %v1416, %v1464
  %v1466 = vpop.f32.mrf.mxu0
  %v1467 = vadd.f32 %v1418, %v1466
  %1468 = vmatmul.bf16.gmra.mxu0 %v1058
  %v1469 = vpop.f32.mrf.mxu0
  %v1470 = vadd.f32 %v1421, %v1469
  %v1471 = vpop.f32.mrf.mxu0
  %v1472 = vadd.f32 %v1423, %v1471
  %1473 = vdwg.mxu0
  %1474 = vmatpush.bf16.msra.mxu0 %v1262
  %1475 = vmatpush.bf16.msra.mxu0 %v1261
  %1476 = vmatpush.bf16.msra.mxu0 %v1260
  %1477 = vmatpush.bf16.msra.mxu0 %v1259
  %1478 = vmatpush.bf16.msra.mxu0 %v1258
  %1479 = vmatpush.bf16.msra.mxu0 %v1257
  %1480 = vmatpush.bf16.msra.mxu0 %v1256
  %1481 = vmatpush.bf16.msra.mxu0 %v1255
  %1482 = vmatmul.bf16.gmra.mxu0 %v1030
  %v1483 = vpop.f32.mrf.mxu0
  %v1484 = vadd.f32 %v1435, %v1483
  %v1485 = vpop.f32.mrf.mxu0
  %v1486 = vadd.f32 %v1437, %v1485
  %1487 = vmatmul.bf16.gmra.mxu0 %v1034
  %v1488 = vpop.f32.mrf.mxu0
  %v1489 = vadd.f32 %v1440, %v1488
  %v1490 = vpop.f32.mrf.mxu0
  %v1491 = vadd.f32 %v1442, %v1490
  %1492 = vmatmul.bf16.gmra.mxu0 %v1038
  %v1493 = vpop.f32.mrf.mxu0
  %v1494 = vadd.f32 %v1445, %v1493
  %v1495 = vpop.f32.mrf.mxu0
  %v1496 = vadd.f32 %v1447, %v1495
  %1497 = vmatmul.bf16.gmra.mxu0 %v1042
  %v1498 = vpop.f32.mrf.mxu0
  %v1499 = vadd.f32 %v1450, %v1498
  %v1500 = vpop.f32.mrf.mxu0
  %v1501 = vadd.f32 %v1452, %v1500
  %1502 = vmatmul.bf16.gmra.mxu0 %v1047
  %v1503 = vpop.f32.mrf.mxu0
  %v1504 = vadd.f32 %v1455, %v1503
  %v1505 = vpop.f32.mrf.mxu0
  %v1506 = vadd.f32 %v1457, %v1505
  %1507 = vmatmul.bf16.gmra.mxu0 %v1051
  %v1508 = vpop.f32.mrf.mxu0
  %v1509 = vadd.f32 %v1460, %v1508
  %v1510 = vpop.f32.mrf.mxu0
  %v1511 = vadd.f32 %v1462, %v1510
  %1512 = vmatmul.bf16.gmra.mxu0 %v1055
  %v1513 = vpop.f32.mrf.mxu0
  %v1514 = vadd.f32 %v1465, %v1513
  %v1515 = vpop.f32.mrf.mxu0
  %v1516 = vadd.f32 %v1467, %v1515
  %1517 = vmatmul.bf16.gmra.mxu0 %v1059
  %v1518 = vpop.f32.mrf.mxu0
  %v1519 = vadd.f32 %v1470, %v1518
  %v1520 = vpop.f32.mrf.mxu0
  %v1521 = vadd.f32 %v1472, %v1520
  %1522 = vdwg.mxu0
  %1523 = vmatpush.bf16.msra.mxu0 0
  %1524 = vmatpush.bf16.msra.mxu0 0
  %1525 = vmatpush.bf16.msra.mxu0 0
  %1526 = vmatpush.bf16.msra.mxu0 0
  %1527 = vmatpush.bf16.msra.mxu0 %v1266
  %1528 = vmatpush.bf16.msra.mxu0 %v1265
  %1529 = vmatpush.bf16.msra.mxu0 %v1264
  %1530 = vmatpush.bf16.msra.mxu0 %v1263
  %1531 = vmatmul.bf16.gmra.mxu0 %v1304
  %v1532 = vpop.f32.mrf.mxu0
  %v1533 = vadd.f32 %v1484, %v1532
  %v1534 = vpop.f32.mrf.mxu0
  %v1535 = vadd.f32 %v1486, %v1534
  %1536 = vmatmul.bf16.gmra.mxu0 %v1307
  %v1537 = vpop.f32.mrf.mxu0
  %v1538 = vadd.f32 %v1489, %v1537
  %v1539 = vpop.f32.mrf.mxu0
  %v1540 = vadd.f32 %v1491, %v1539
  %1541 = vmatmul.bf16.gmra.mxu0 %v1310
  %v1542 = vpop.f32.mrf.mxu0
  %v1543 = vadd.f32 %v1494, %v1542
  %v1544 = vpop.f32.mrf.mxu0
  %v1545 = vadd.f32 %v1496, %v1544
  %1546 = vmatmul.bf16.gmra.mxu0 %v1313
  %v1547 = vpop.f32.mrf.mxu0
  %v1548 = vadd.f32 %v1499, %v1547
  %v1549 = vpop.f32.mrf.mxu0
  %v1550 = vadd.f32 %v1501, %v1549
  %1551 = vmatmul.bf16.gmra.mxu0 %v1316
  %v1552 = vpop.f32.mrf.mxu0
  %v1553 = vadd.f32 %v1504, %v1552
  %v1554 = vpop.f32.mrf.mxu0
  %v1555 = vadd.f32 %v1506, %v1554
  %1556 = vmatmul.bf16.gmra.mxu0 %v1319
  %v1557 = vpop.f32.mrf.mxu0
  %v1558 = vadd.f32 %v1509, %v1557
  %v1559 = vpop.f32.mrf.mxu0
  %v1560 = vadd.f32 %v1511, %v1559
  %1561 = vmatmul.bf16.gmra.mxu0 %v1322
  %v1562 = vpop.f32.mrf.mxu0
  %v1563 = vadd.f32 %v1514, %v1562
  %v1564 = vpop.f32.mrf.mxu0
  %v1565 = vadd.f32 %v1516, %v1564
  %1566 = vmatmul.bf16.gmra.mxu0 %v1325
  %v1567 = vpop.f32.mrf.mxu0
  %v1568 = vadd.f32 %v1519, %v1567
  %v1569 = vpop.f32.mrf.mxu0
  %v1570 = vadd.f32 %v1521, %v1569
  %1571 = vdwg.mxu0
  %v1572 = vpack.c.bf16 %v1533, %v1533
  %v1573 = vpack.c.bf16 %v1535, %v1535
  %v1574 = vpack.c.bf16 %v1538, %v1538
  %v1575 = vpack.c.bf16 %v1540, %v1540
  %v1576 = vpack.c.bf16 %v1543, %v1543
  %v1577 = vpack.c.bf16 %v1545, %v1545
  %v1578 = vpack.c.bf16 %v1548, %v1548
  %v1579 = vpack.c.bf16 %v1550, %v1550
  %v1580 = vpack.c.bf16 %v1553, %v1553
  %v1581 = vpack.c.bf16 %v1555, %v1555
  %v1582 = vpack.c.bf16 %v1558, %v1558
  %v1583 = vpack.c.bf16 %v1560, %v1560
  %v1584 = vpack.c.bf16 %v1563, %v1563
  %v1585 = vpack.c.bf16 %v1565, %v1565
  %v1586 = vpack.c.bf16 %v1568, %v1568
  %v1587 = vpack.c.bf16 %v1570, %v1570
  %vm1588 = vcmask 60416
  %1589 = vst.msk [vmem:[%s5] sm:$0xf] %vm1588, %v1572
  %1590 = vst.msk [vmem:[%s5 + $0x4] sm:$0xf] %vm1588, %v1573
  %1591 = vst.msk [vmem:[%s5 + $0x8] sm:$0xf] %vm1588, %v1574
  %1592 = vst.msk [vmem:[%s5 + $0xc] sm:$0xf] %vm1588, %v1575
  %1593 = vst.msk [vmem:[%s5 + $0x10] sm:$0xf] %vm1588, %v1576
  %1594 = vst.msk [vmem:[%s5 + $0x14] sm:$0xf] %vm1588, %v1577
  %1595 = vst.msk [vmem:[%s5 + $0x18] sm:$0xf] %vm1588, %v1578
  %1596 = vst.msk [vmem:[%s5 + $0x1c] sm:$0xf] %vm1588, %v1579
  %1597 = vst.msk [vmem:[%s5 + $0x20] sm:$0xf] %vm1588, %v1580
  %1598 = vst.msk [vmem:[%s5 + $0x24] sm:$0xf] %vm1588, %v1581
  %1599 = vst.msk [vmem:[%s5 + $0x28] sm:$0xf] %vm1588, %v1582
  %1600 = vst.msk [vmem:[%s5 + $0x2c] sm:$0xf] %vm1588, %v1583
  %1601 = vst.msk [vmem:[%s5 + $0x30] sm:$0xf] %vm1588, %v1584
  %1602 = vst.msk [vmem:[%s5 + $0x34] sm:$0xf] %vm1588, %v1585
  %1603 = vst.msk [vmem:[%s5 + $0x38] sm:$0xf] %vm1588, %v1586
  %1604 = vst.msk [vmem:[%s5 + $0x3c] sm:$0xf] %vm1588, %v1587
  // Predicated region
  $region22: #{discriminator_forward.1} parent=0 // pred_check
    _
  $region23: #{discriminator_forward.1} parent=0 // pred_check_branch
    %1606 = sbr.rel (0) target = $region25
  $region24: #{discriminator_forward.1} parent=0 // pred_region
    _
  $region25: #{discriminator_forward.1} parent=0 // pred_fallthru
    _
  // Predicated region
  $region26: #{discriminator_forward.1} parent=0 // pred_check
    _
  $region27: #{discriminator_forward.1} parent=0 // pred_check_branch
    %1608 = sbr.rel (0) target = $region29
  $region28: #{discriminator_forward.1} parent=0 // pred_region
    _
  $region29: #{discriminator_forward.1} parent=0 // pred_fallthru
    _

</llo_original>
